<compile_context>
chip_gen: v7x
topology: tpu7x:2x2x1
jax: 0.10.0
libtpu: 0.0.40
codegen_flags: <defaults>
</compile_context>

<pallas_src>
import functools

import jax
import jax.numpy as jnp
from jax import lax
from jax.experimental import pallas as pl
from jax.experimental.pallas import tpu as pltpu


def _focal_loss_kernel(logits_ref, targets_ref, out_ref, *, n_total, tile_n,
                       alpha, gamma, compute_f32, targets_resident):
    p = pl.program_id(0)            # part index (megacore-parallel axis)
    k = pl.program_id(1)            # tile index within the part (reduction axis)
    k_steps = pl.num_programs(1)

    # zero the resident per-part accumulator block (unconditional at k == 0)
    @pl.when(k == 0)
    def _():
        out_ref[...] = jnp.zeros_like(out_ref)

    tile_idx = p * k_steps + k
    rows_start = tile_idx * tile_n

    # skip all compute on fully-masked tiles (clamped duplicate / out-of-range);
    # their (clamped) logits DMA still happens but no VPU/EUP work is done.
    @pl.when(rows_start < n_total)
    def _():
        x = logits_ref[...]                          # (tile_n, C) native dtype
        if compute_f32:
            x = x.astype(jnp.float32)                # f32 path (v5e / f32 input)

        if targets_resident:
            start = pl.multiple_of(k * tile_n, 8)
            t = targets_ref[pl.ds(start, tile_n), :]     # (tile_n, 1) int32
        else:
            t = targets_ref[...]                         # (tile_n, 1) int32

        # numerically-stable log-sum-exp over the class (lane) axis; tile-wide
        # math stays in x.dtype (bf16 on v6e/v7x), class-sum accumulates in f32.
        m = jnp.max(x, axis=-1, keepdims=True)
        e = jnp.exp(x - m)
        se = jnp.sum(e, axis=-1, keepdims=True, dtype=jnp.float32)
        lse = m.astype(jnp.float32) + jnp.log(se)

        # one-hot gather of the target logit (exact in any dtype: the lane sum
        # picks exactly one stored value, the rest are zeros).
        col = lax.broadcasted_iota(jnp.int32, x.shape, 1)
        tgt = jnp.sum(jnp.where(col == t, x, 0),
                      axis=-1, keepdims=True, dtype=jnp.float32)

        ce = lse - tgt                               # (tile_n, 1) per-sample CE
        pt = jnp.exp(-ce)
        q = jnp.maximum(1.0 - pt, 0.0)               # clamp: no NaN from rounding
        if gamma == 2.0:
            mod = q * q                              # exact, one VPU mul (no pow)
        else:
            mod = q ** gamma
        focal = mod * ce                             # (tile_n, 1) f32

        # mask rows past the true batch size (tail tile)
        row_ids = lax.broadcasted_iota(jnp.int32, focal.shape, 0)
        focal = jnp.where(row_ids < (n_total - rows_start), focal, 0.0)

        # pre-scale by alpha / N so the f32 partials stay O(1) for huge N
        tile_sum = jnp.sum(focal) * (alpha / n_total)

        # invariant: every element of the resident (8, 128) block carries the
        # same running partial; the wrapper reads element [0] of each block.
        out_ref[...] = out_ref[...] + tile_sum


def _device_kind():
    try:
        return jax.devices()[0].device_kind.lower()
    except Exception:
        return ""


def focal_loss(logits, targets, *, alpha=1.0, gamma=2.0, tile_n=None,
               num_parts=None, compute_dtype=None):
    """logits: (N, C) float (any dtype), targets: (N,) int class indices."""
    n, c = logits.shape
    kind = _device_kind()
    is_v7 = "v7" in kind

    # one resident part per TensorCore: 2 on v7x, 1 on v5e/v6e (single TC).
    if num_parts is None:
        num_parts = 2 if is_v7 else 1

    # bf16 VPU/EUP exist on v6e/v7x; keep f32 compute on v5e and for f32 inputs.
    if compute_dtype is None:
        bf16_native_ok = ("v6" in kind) or is_v7
        compute_f32 = not (logits.dtype == jnp.bfloat16 and bf16_native_ok)
    else:
        compute_f32 = jnp.dtype(compute_dtype) == jnp.dtype(jnp.float32)

    # --- tile sizing against the in-kernel working set ----------------------
    itemsize = jnp.dtype(logits.dtype).itemsize
    compute_itemsize = 4 if compute_f32 else itemsize
    row_bytes = c * itemsize
    # live VMEM per tile row ~= 2x native (double-buffered input)
    #                          + ~2x compute-dtype copies ((x - m), exp(x - m))
    working_row_bytes = 2 * row_bytes + 2 * c * compute_itemsize
    if is_v7:
        native_cap_bytes = 4 * 1024 * 1024        # v7x: 64 MiB VMEM per TC
        working_budget = 26 * 1024 * 1024
        vmem_limit = 48 * 1024 * 1024
    else:
        native_cap_bytes = 8 * 1024 * 1024        # v5e/v6e: 128 MiB VMEM
        working_budget = 40 * 1024 * 1024
        vmem_limit = 64 * 1024 * 1024

    if tile_n is None:
        cap = min(native_cap_bytes // max(row_bytes, 1),
                  working_budget // max(working_row_bytes, 1))
        cap = max(8, (cap // 8) * 8)
        tile_n = n if n <= cap else cap
    tile_n = min(tile_n, n)
    if tile_n != n and tile_n % 8 != 0:
        tile_n = max(8, (tile_n // 8) * 8)

    total_tiles = pl.cdiv(n, tile_n)
    k_steps = pl.cdiv(total_tiles, num_parts)
    padded_n = num_parts * k_steps * tile_n

    targets_i32 = targets.astype(jnp.int32).reshape(n, 1)

    def tile_index(p, k):
        # clamp so out-of-range (fully masked) tiles never DMA out of bounds
        return (jnp.minimum(p * k_steps + k, total_tiles - 1), 0)

    # targets column resident across the whole reduction axis (one DMA per part)
    # whenever padding + aligned dynamic slicing is cheap; else per-tile blocks.
    targets_resident = (tile_n % 8 == 0) and (padded_n * 4 <= 4 * 1024 * 1024)
    if targets_resident:
        targets_in = (jnp.pad(targets_i32, ((0, padded_n - n), (0, 0)))
                      if padded_n != n else targets_i32)
        targets_spec = pl.BlockSpec((k_steps * tile_n, 1), lambda p, k: (p, 0))
    else:
        targets_in = targets_i32
        targets_spec = pl.BlockSpec((tile_n, 1), tile_index)

    kernel = functools.partial(
        _focal_loss_kernel, n_total=n, tile_n=tile_n, alpha=float(alpha),
        gamma=float(gamma), compute_f32=compute_f32,
        targets_resident=targets_resident)

    out = pl.pallas_call(
        kernel,
        out_shape=jax.ShapeDtypeStruct((num_parts * 8, 128), jnp.float32),
        grid_spec=pltpu.PrefetchScalarGridSpec(
            num_scalar_prefetch=0,
            grid=(num_parts, k_steps),
            in_specs=[
                # logits, DMA'd in their native dtype (bf16 stays bf16 in HBM).
                # TODO(synk): sweep pipeline_mode=pl.Buffered(3) on DMA-bound
                # f32 configs (costs one extra native tile of VMEM).
                pl.BlockSpec((tile_n, c), tile_index),
                targets_spec,
            ],
            out_specs=pl.BlockSpec((8, 128), lambda p, k: (p, 0)),
        ),
        compiler_params=pltpu.CompilerParams(
            dimension_semantics=("parallel", "arbitrary"),
            vmem_limit_bytes=vmem_limit),
    )(logits, targets_in)

    # one partial (already scaled by alpha/N) per part -> the mean is the sum.
    return jnp.sum(out[::8, 0])


def focal_loss_ref(logits, targets, alpha=1.0, gamma=2.0):
    # pure-JAX reference (matches F.cross_entropy + focal modulation, mean)
    x = logits.astype(jnp.float32)
    lse = jax.nn.logsumexp(x, axis=-1)
    tgt = jnp.take_along_axis(x, targets[:, None].astype(jnp.int32), axis=-1)[:, 0]
    ce = lse - tgt
    pt = jnp.exp(-ce)
    return jnp.mean(alpha * (1.0 - pt) ** gamma * ce)


if __name__ == "__main__":
    key = jax.random.PRNGKey(0)
    k1, k2, k3, k4 = jax.random.split(key, 4)

    # case 1: f32 logits, batch not a multiple of the tile -> exercises tiling,
    # tail-row masking, the resident targets column and (on v7x) the clamped,
    # fully-masked duplicate tile that is skipped via pl.when.
    N1, C1 = 20, 32
    logits1 = jax.random.normal(k1, (N1, C1), dtype=jnp.float32)
    targets1 = jax.random.randint(k2, (N1,), 0, C1, dtype=jnp.int32)
    loss1 = jax.block_until_ready(focal_loss(logits1, targets1, tile_n=8))
    ref1 = jax.block_until_ready(focal_loss_ref(logits1, targets1))
    assert jnp.allclose(loss1, ref1, rtol=1e-5, atol=1e-5), (loss1, ref1)

    # case 2: bf16 logits DMA'd natively; on v6e/v7x the tile-wide math runs in
    # bf16 (hence the looser tolerance), on v5e it upcasts to f32 in-kernel.
    N2, C2 = 16, 48
    logits2 = jax.random.normal(k3, (N2, C2), dtype=jnp.bfloat16)
    targets2 = jax.random.randint(k4, (N2,), 0, C2, dtype=jnp.int32)
    loss2 = jax.block_until_ready(focal_loss(logits2, targets2))
    ref2 = jax.block_until_ready(focal_loss_ref(logits2, targets2))
    assert jnp.allclose(loss2, ref2, rtol=2e-2, atol=2e-2), (loss2, ref2)

    print("KERNEL_OK")
</pallas_src>

<mosaic_0001>
module attributes {stable_mosaic.version = 11 : i64} {
  func.func @_focal_loss_kernel(%arg0: i32, %arg1: i32, %arg2: memref<8x32xf32, #tpu.memory_space<vmem>>, %arg3: memref<24x1xi32, #tpu.memory_space<vmem>>, %arg4: memref<8x128xf32, #tpu.memory_space<vmem>>) attributes {dimension_semantics = [#tpu.dimension_semantics<parallel>, #tpu.dimension_semantics<arbitrary>], iteration_bounds = array<i64: 1, 3>, scalar_prefetch = 0 : i64, scratch_operands = 0 : i64, tpu.core_type = #tpu.core_type<tc>, window_params = [{transform_indices = @transform_0, window_bounds = array<i64: 8, 32>}, {transform_indices = @transform_1, window_bounds = array<i64: 24, 1>}, {transform_indices = @transform_2, window_bounds = array<i64: 8, 128>}]} {
    %c0_i32 = arith.constant 0 : i32
    %0 = arith.cmpi eq, %arg1, %c0_i32 : i32
    %1 = arith.extui %0 : i1 to i32
    %c0_i32_0 = arith.constant 0 : i32
    %2 = arith.cmpi ne, %1, %c0_i32_0 : i32
    scf.if %2 {
      %cst = arith.constant 0.000000e+00 : f32
      %9 = vector.broadcast %cst : f32 to vector<8x128xf32>
      %c0 = arith.constant 0 : index
      %c0_2 = arith.constant 0 : index
      %10 = vector.load %arg4[%c0, %c0_2] : memref<8x128xf32, #tpu.memory_space<vmem>>, vector<8x128xf32>
      tpu.vector_store %arg4[%c0, %c0_2], %9 {strides = array<i32>} : memref<8x128xf32, #tpu.memory_space<vmem>>, vector<8x128xf32>,
    } else {
    }
    %c3_i32 = arith.constant 3 : i32
    %3 = arith.muli %arg0, %c3_i32 : i32
    %4 = arith.addi %3, %arg1 : i32
    %c8_i32 = arith.constant 8 : i32
    %5 = arith.muli %4, %c8_i32 : i32
    %c20_i32 = arith.constant 20 : i32
    %6 = arith.cmpi slt, %5, %c20_i32 : i32
    %7 = arith.extui %6 : i1 to i32
    %c0_i32_1 = arith.constant 0 : i32
    %8 = arith.cmpi ne, %7, %c0_i32_1 : i32
    scf.if %8 {
      %c0 = arith.constant 0 : index
      %c0_2 = arith.constant 0 : index
      %9 = vector.load %arg2[%c0, %c0_2] : memref<8x32xf32, #tpu.memory_space<vmem>>, vector<8x32xf32>
      %c8_i32_3 = arith.constant 8 : i32
      %10 = arith.muli %arg1, %c8_i32_3 : i32
      %11 = tpu.assume_multiple %10, 8 : i32
      %12 = arith.index_cast %11 : i32 to index
      %c0_4 = arith.constant 0 : index
      %13 = vector.load %arg3[%12, %c0_4] : memref<24x1xi32, #tpu.memory_space<vmem>>, vector<8x1xi32>
      %cst = arith.constant dense<0xFF800000> : vector<8xf32>
      %14 = vector.multi_reduction <maximumf>, %9, %cst [1] : vector<8x32xf32> to vector<8xf32>
      %15 = vector.shape_cast %14 : vector<8xf32> to vector<8x1xf32>
      %16 = vector.broadcast %15 : vector<8x1xf32> to vector<8x32xf32>
      %17 = arith.subf %9, %16 : vector<8x32xf32>
      %18 = math.exp %17 : vector<8x32xf32>
      %cst_5 = arith.constant dense<0.000000e+00> : vector<8xf32>
      %19 = vector.multi_reduction <add>, %18, %cst_5 [1] : vector<8x32xf32> to vector<8xf32>
      %20 = vector.shape_cast %19 : vector<8xf32> to vector<8x1xf32>
      %21 = math.log %20 : vector<8x1xf32>
      %22 = arith.addf %15, %21 : vector<8x1xf32>
      %23 = tpu.iota {dimensions = array<i32: 1>} : vector<8x32xi32>
      %24 = vector.broadcast %13 : vector<8x1xi32> to vector<8x32xi32>
      %25 = arith.cmpi eq, %23, %24 : vector<8x32xi32>
      %c0_i32_6 = arith.constant 0 : i32
      %26 = arith.sitofp %c0_i32_6 : i32 to f32
      %27 = vector.broadcast %26 : f32 to vector<8x32xf32>
      %28 = arith.select %25, %9, %27 : vector<8x32xi1>, vector<8x32xf32>
      %cst_7 = arith.constant dense<0.000000e+00> : vector<8xf32>
      %29 = vector.multi_reduction <add>, %28, %cst_7 [1] : vector<8x32xf32> to vector<8xf32>
      %30 = vector.shape_cast %29 : vector<8xf32> to vector<8x1xf32>
      %31 = arith.subf %22, %30 : vector<8x1xf32>
      %cst_8 = arith.constant 0.000000e+00 : f32
      %32 = vector.broadcast %cst_8 : f32 to vector<8x1xf32>
      %33 = arith.subf %32, %31 : vector<8x1xf32>
      %34 = math.exp %33 : vector<8x1xf32>
      %cst_9 = arith.constant 1.000000e+00 : f32
      %35 = vector.broadcast %cst_9 : f32 to vector<8x1xf32>
      %36 = arith.subf %35, %34 : vector<8x1xf32>
      %cst_10 = arith.constant 0.000000e+00 : f32
      %37 = vector.broadcast %cst_10 : f32 to vector<8x1xf32>
      %38 = arith.maximumf %36, %37 : vector<8x1xf32>
      %39 = arith.mulf %38, %38 : vector<8x1xf32>
      %40 = arith.mulf %39, %31 : vector<8x1xf32>
      %41 = tpu.iota {dimensions = array<i32: 0>} : vector<8x1xi32>
      %c20_i32_11 = arith.constant 20 : i32
      %42 = arith.subi %c20_i32_11, %5 : i32
      %43 = vector.broadcast %42 : i32 to vector<8x1xi32>
      %44 = arith.cmpi slt, %41, %43 : vector<8x1xi32>
      %cst_12 = arith.constant 0.000000e+00 : f32
      %45 = vector.broadcast %cst_12 : f32 to vector<8x1xf32>
      %46 = arith.select %44, %40, %45 : vector<8x1xi1>, vector<8x1xf32>
      %47 = vector.shape_cast %46 : vector<8x1xf32> to vector<1x8x1xf32>
      %cst_13 = arith.constant dense<0.000000e+00> : vector<1xf32>
      %48 = vector.multi_reduction <add>, %47, %cst_13 [1, 2] : vector<1x8x1xf32> to vector<1xf32>
      %49 = vector.shape_cast %48 : vector<1xf32> to vector<1x1x1xf32>
      %50 = vector.extract %49[0, 0, 0] : f32 from vector<1x1x1xf32>
      %cst_14 = arith.constant 5.000000e-02 : f32
      %51 = arith.mulf %50, %cst_14 : f32
      %c0_15 = arith.constant 0 : index
      %c0_16 = arith.constant 0 : index
      %52 = vector.load %arg4[%c0_15, %c0_16] : memref<8x128xf32, #tpu.memory_space<vmem>>, vector<8x128xf32>
      %53 = vector.broadcast %51 : f32 to vector<8x128xf32>
      %54 = arith.addf %52, %53 : vector<8x128xf32>
      %c0_17 = arith.constant 0 : index
      %c0_18 = arith.constant 0 : index
      %55 = vector.load %arg4[%c0_17, %c0_18] : memref<8x128xf32, #tpu.memory_space<vmem>>, vector<8x128xf32>
      tpu.vector_store %arg4[%c0_17, %c0_18], %54 {strides = array<i32>} : memref<8x128xf32, #tpu.memory_space<vmem>>, vector<8x128xf32>,
    } else {
    }
    return
  }
  func.func @transform_0(%arg0: i32, %arg1: i32) -> (i32, i32) {
    %c3_i32 = arith.constant 3 : i32
    %0 = arith.muli %arg0, %c3_i32 : i32
    %1 = arith.addi %0, %arg1 : i32
    %c2_i32 = arith.constant 2 : i32
    %2 = arith.minsi %1, %c2_i32 : i32
    %c0_i32 = arith.constant 0 : i32
    %c0_i32_0 = arith.constant 0 : i32
    return %2, %c0_i32 : i32, i32
  }
  func.func @transform_1(%arg0: i32, %arg1: i32) -> (i32, i32) {
    %c0_i32 = arith.constant 0 : i32
    %c0_i32_0 = arith.constant 0 : i32
    return %arg0, %c0_i32 : i32, i32
  }
  func.func @transform_2(%arg0: i32, %arg1: i32) -> (i32, i32) {
    %c0_i32 = arith.constant 0 : i32
    %c0_i32_0 = arith.constant 0 : i32
    return %arg0, %c0_i32 : i32, i32
  }
}

</mosaic_0001>

<llo_original>
// kernel: tpu_custom_call.1
$region0: #{tpu_custom_call.1}
  #allocation0 [shape = 'u32[]', space=smem, size = 0x4, offset = 0x4, fixed_abs, tag = 'smem constant byte address 0x4 - core index']
  #allocation1 [shape = 'u32[144,128]{1,0:T(1,128)}', space=vmem, size = 0x12000, scoped, tag = 'internal scratch']
  %s0 = inlined_call_operand.hbm [shape: f32[20,32], index: 0, kind: input, shape index: {}]
  %s1 = inlined_call_operand.hbm [shape: s32[24,1], index: 1, kind: input, shape index: {}]
  %s2 = inlined_call_operand.hbm [shape: f32[8,128], index: 2, kind: output, shape index: {}]
  %s3 = sld [smem:[#allocation0]]
  $region57: #{tpu_custom_call.1} parent=0
    _
  %s5 = ssub.s32 1, %s3
  %s6 = scalar_select 0, %s5, %s3
  $region1: #{tpu_custom_call.1} parent=0
    #allocation2 [shape = 'u8[8192]{0}', space=vmem, size = 0x2000, scoped, tag = 'input window, operand 0']
    #allocation3 [shape = 's32[2]{0}', space=sflag, size = 0x8, scoped, tag = 'scoped memory for tpu_custom_call.1']
    #allocation4 [shape = 's32[2]{0}', space=sflag, size = 0x8, scoped, tag = 'scoped memory for tpu_custom_call.1']
    #allocation5 [shape = 'u8[12288]{0}', space=vmem, size = 0x3000, scoped, tag = 'input window, operand 1, single buffered']
    #allocation6 [shape = 's32[1]{0}', space=sflag, size = 0x4, scoped, tag = 'scoped memory for tpu_custom_call.1']
    #allocation7 [shape = 'u8[4096]{0}', space=vmem, size = 0x1000, scoped, tag = 'output window, operand 0, single buffered']
    %7 = vsyncpa [#allocation3], 0
    %s8 = scalar_lea.sflag [#allocation3], 1
    %9 = vsyncpa %s8, 0
    %10 = vsyncpa [#allocation6], 0
    %11 = vsyncpa [#allocation4], 0
    loop: start=0, step=1, limit=5
    $region2: #{tpu_custom_call.1} parent=1 // loop_pre_header
      _
    $region3: #{tpu_custom_call.1} parent=1 // loop_header
      %s13 = sphi 0, %s17
      %p14 = scmp.ge.s32.totalorder %s13, 5
      %s20 = sphi 0, %s32
      %s21 = sphi 0, %s28
      %s22 = sphi 0, %s20
      %s23 = sphi 0, %s21
      %s24 = sphi 0, %s22
      %s25 = sphi 0, %s23
      %s43 = sphi 0, %s45
      %s46 = sphi 0, %s43
      %s47 = sphi 0, %s46
      %s63 = sphi 0, %s47
      %s69 = sphi 0, %s71
      %s72 = sphi 0, %s69
      %s73 = sphi 0, %s72
      %s89 = sphi 0, %s73
      %s95 = sphi 0, %s97
      %s98 = sphi 0, %s95
      %s99 = sphi 0, %s98
      %s115 = sphi 0, %s99
    $region4: #{tpu_custom_call.1} parent=1 // loop_header_branch
      %16 = sbr.rel (%p14) target = $region8
    $region5: #{tpu_custom_call.1} parent=1 // loop_body
      %s18 = ssub.s32 %s13, 1
      %s19 = ssub.s32 %s13, 2
      %s26 = sadd.s32 1, %s21
      %p27 = scmp.ge.s32.totalorder %s26, 3
      %s28 = scalar_select %p27, 0, %s26
      %s29 = sadd.s32 1, %s20
      %s30 = scalar_select %p27, %s29, %s20
      %p31 = scmp.ge.s32.totalorder %s30, 1
      %s32 = scalar_select %p31, 0, %s30
      %s33 = smul.u32 %s20, 3
      %s34 = sadd.s32 %s33, %s21
      %p35 = scmp.lt.s32.totalorder %s34, 2
      %s36 = scalar_select %p35, %s34, 2
      %s37 = smul.u32 %s32, 3
      %s38 = sadd.s32 %s37, %s28
      %p39 = scmp.lt.s32.totalorder %s38, 2
      %s40 = scalar_select %p39, %s38, 2
      %s41 = ssub.s32 %s36, %s40
      %p42 = scmp.eq.s32.totalorder %s41, 0
      %s44 = sadd.s32 %s43, 1
      %s45 = scalar_select %p42, %s43, %s44
      %p48 = pneg %p42
      %p49 = scmp.eq.s32.totalorder %s13, 2
      %p50 = por %p48, %p49
      %p51 = scmp.ne.s32.totalorder %s43, %s46
      %p52 = scmp.eq.s32.totalorder %s13, 0
      %p53 = por %p51, %p52
      %p54 = scmp.ne.s32.totalorder %s43, %s46
      %p55 = scmp.eq.s32.totalorder %s18, 2
      %p56 = por %p54, %p55
      %p57 = scmp.ne.s32.totalorder %s46, %s47
      %p58 = scmp.eq.s32.totalorder %s18, 0
      %p59 = por %p57, %p58
      %p60 = scmp.ne.s32.totalorder %s46, %s47
      %p61 = scmp.eq.s32.totalorder %s19, 2
      %p62 = por %p60, %p61
      %p64 = scmp.ne.s32.totalorder %s47, %s63
      %p65 = scmp.eq.s32.totalorder %s19, 0
      %p66 = por %p64, %p65
      %s67 = ssub.s32 %s20, %s32
      %p68 = scmp.eq.s32.totalorder %s67, 0
      %s70 = sadd.s32 %s69, 1
      %s71 = scalar_select %p68, %s69, %s70
      %p74 = pneg %p68
      %p75 = scmp.eq.s32.totalorder %s13, 2
      %p76 = por %p74, %p75
      %p77 = scmp.ne.s32.totalorder %s69, %s72
      %p78 = scmp.eq.s32.totalorder %s13, 0
      %p79 = por %p77, %p78
      %p80 = scmp.ne.s32.totalorder %s69, %s72
      %p81 = scmp.eq.s32.totalorder %s18, 2
      %p82 = por %p80, %p81
      %p83 = scmp.ne.s32.totalorder %s72, %s73
      %p84 = scmp.eq.s32.totalorder %s18, 0
      %p85 = por %p83, %p84
      %p86 = scmp.ne.s32.totalorder %s72, %s73
      %p87 = scmp.eq.s32.totalorder %s19, 2
      %p88 = por %p86, %p87
      %p90 = scmp.ne.s32.totalorder %s73, %s89
      %p91 = scmp.eq.s32.totalorder %s19, 0
      %p92 = por %p90, %p91
      %s93 = ssub.s32 %s20, %s32
      %p94 = scmp.eq.s32.totalorder %s93, 0
      %s96 = sadd.s32 %s95, 1
      %s97 = scalar_select %p94, %s95, %s96
      %p100 = pneg %p94
      %p101 = scmp.eq.s32.totalorder %s13, 2
      %p102 = por %p100, %p101
      %p103 = scmp.ne.s32.totalorder %s95, %s98
      %p104 = scmp.eq.s32.totalorder %s13, 0
      %p105 = por %p103, %p104
      %p106 = scmp.ne.s32.totalorder %s95, %s98
      %p107 = scmp.eq.s32.totalorder %s18, 2
      %p108 = por %p106, %p107
      %p109 = scmp.ne.s32.totalorder %s98, %s99
      %p110 = scmp.eq.s32.totalorder %s18, 0
      %p111 = por %p109, %p110
      %p112 = scmp.ne.s32.totalorder %s98, %s99
      %p113 = scmp.eq.s32.totalorder %s19, 2
      %p114 = por %p112, %p113
      %p116 = scmp.ne.s32.totalorder %s99, %s115
      %p117 = scmp.eq.s32.totalorder %s19, 0
      %p118 = por %p116, %p117
      %p119 = scmp.le.s32.totalorder 1, %s13
      %p120 = scmp.lt.s32.totalorder %s13, 4
      %p121 = pnand %p119, %p120
      %p122 = pneg %p121
      // Predicated region
      $region9: #{tpu_custom_call.1} parent=5 // pred_check
        _
      $region10: #{tpu_custom_call.1} parent=5 // pred_check_branch
        %124 = sbr.rel (%p121) target = $region12
      $region11: #{tpu_custom_call.1} parent=5 // pred_region
        %s125 = ssub.s32 %s13, 1
        // Predicated region
        $region13: #{tpu_custom_call.1} parent=11 // pred_check
          %p126 = pneg %p85
        $region14: #{tpu_custom_call.1} parent=11 // pred_check_branch
          %128 = sbr.rel (%p126) target = $region16
        $region15: #{tpu_custom_call.1} parent=11 // pred_region
          %s129 = smul.u32 3, %s22
          %s131 = ssub.s32 384, 384
          %132 = vsyncadd [#allocation6], %s131
          %s133 = smul.addr %s129, 128
          %s134 = scalar_lea.hbm %s1, %s133
          %s135 = sshll.u32 [#allocation5], 4
          %s136 = int_to_ptr.vmem [resolvable:$true] %s135
          %141 = dma.hbm_to_vmem [thread:$0]  %s134, 384, %s136, [#allocation6], 128, 128, 8
        $region16: #{tpu_custom_call.1} parent=11 // pred_fallthru
          _
      $region12: #{tpu_custom_call.1} parent=5 // pred_fallthru
        _
      %p142 = scmp.lt.s32.totalorder %s13, 3
      // Predicated region
      $region17: #{tpu_custom_call.1} parent=5 // pred_check
        %p143 = pneg %p142
      $region18: #{tpu_custom_call.1} parent=5 // pred_check_branch
        %145 = sbr.rel (%p143) target = $region20
      $region19: #{tpu_custom_call.1} parent=5 // pred_region
        // Predicated region
        $region21: #{tpu_custom_call.1} parent=19 // pred_check
          %p146 = pneg %p53
        $region22: #{tpu_custom_call.1} parent=19 // pred_check_branch
          %148 = sbr.rel (%p146) target = $region24
        $region23: #{tpu_custom_call.1} parent=19 // pred_region
          %s149 = sand.u32 %s43, 1
          %s150 = scalar_lea.sflag [#allocation3], %s149
          %s151 = sand.u32 %s43, 1
          %s152 = smul.addr %s151, 8
          %s153 = scalar_lea.vmem [#allocation2], %s152
          %s154 = smul.u32 %s20, 3
          %s155 = sadd.s32 %s154, %s21
          %p156 = scmp.lt.s32.totalorder %s155, 2
          %s157 = scalar_select %p156, %s155, 2
          %s159 = ssub.s32 128, 128
          %160 = vsyncadd %s150, %s159
          %s161 = smul.addr %s157, 128
          %s162 = scalar_lea.hbm %s0, %s161
          %s164 = sshll.u32 %s153, 4
          %s165 = int_to_ptr.vmem [resolvable:$true] %s164
          %167 = dma.hbm_to_vmem [thread:$0]  %s162, 128, %s165, %s150
        $region24: #{tpu_custom_call.1} parent=19 // pred_fallthru
          _
      $region20: #{tpu_custom_call.1} parent=5 // pred_fallthru
        _
      %p168 = scmp.le.s32.totalorder 1, %s13
      %p169 = scmp.lt.s32.totalorder %s13, 4
      %p170 = pnand %p168, %p169
      %p171 = pneg %p170
      // Predicated region
      $region25: #{tpu_custom_call.1} parent=5 // pred_check
        _
      $region26: #{tpu_custom_call.1} parent=5 // pred_check_branch
        %173 = sbr.rel (%p170) target = $region28
      $region27: #{tpu_custom_call.1} parent=5 // pred_region
        %s174 = ssub.s32 %s13, 1
        %s175 = sand.u32 %s46, 1
        %s176 = scalar_lea.sflag [#allocation3], %s175
        %s177 = sand.u32 %s46, 1
        %s178 = smul.addr %s177, 8
        %s179 = scalar_lea.vmem [#allocation2], %s178
        // Predicated region
        $region29: #{tpu_custom_call.1} parent=27 // pred_check
          %p180 = pneg %p59
        $region30: #{tpu_custom_call.1} parent=27 // pred_check_branch
          %182 = sbr.rel (%p180) target = $region32
        $region31: #{tpu_custom_call.1} parent=27 // pred_region
          %183 = dma.done %s176, 128
        $region32: #{tpu_custom_call.1} parent=27 // pred_fallthru
          _
        // Predicated region
        $region33: #{tpu_custom_call.1} parent=27 // pred_check
          %p184 = pneg %p85
        $region34: #{tpu_custom_call.1} parent=27 // pred_check_branch
          %186 = sbr.rel (%p184) target = $region36
        $region35: #{tpu_custom_call.1} parent=27 // pred_region
          %187 = dma.done [#allocation6], 384
        $region36: #{tpu_custom_call.1} parent=27 // pred_fallthru
          _
        %s188 = sand.u32 %s46, 1
        %s189 = scalar_lea.sflag [#allocation3], %s188
        %s190 = sand.u32 %s46, 1
        %s191 = smul.addr %s190, 8
        %s192 = scalar_lea.vmem [#allocation2], %s191
        %p193 = pneg %p59
        %p194 = pneg %p56
        %p195 = pneg %p85
        %p196 = pneg %p82
        %p197 = pneg %p111
        %p198 = pneg %p108
        %s199 = smul.u32 %s22, 3
        %s200 = sadd.s32 %s199, %s23
        %p201 = scmp.lt.s32.totalorder %s200, 2
        %s202 = scalar_select %p201, %s200, 2
        %s203 = smul.u32 3, %s22
        %p204 = scmp.eq.s32.totalorder %s23, 0
        // Predicated region
        $region37: #{tpu_custom_call.1} parent=27 // pred_check
          %p205 = pneg %p204
        $region38: #{tpu_custom_call.1} parent=27 // pred_check_branch
          %207 = sbr.rel (%p205) target = $region40
        $region39: #{tpu_custom_call.1} parent=27 // pred_region
          %208 = vst [vmem:[#allocation7] sm:$0xff] 0.0
        $region40: #{tpu_custom_call.1} parent=27 // pred_fallthru
          _
        %s209 = smul.u32 %s22, 3
        %s210 = sadd.s32 %s209, %s23
        %s211 = smul.u32 %s210, 8
        %p212 = scmp.lt.s32.totalorder %s211, 20
        // Predicated region
        $region41: #{tpu_custom_call.1} parent=27 // pred_check
          %p213 = pneg %p212
        $region42: #{tpu_custom_call.1} parent=27 // pred_check_branch
          %215 = sbr.rel (%p213) target = $region44
        $region43: #{tpu_custom_call.1} parent=27 // pred_region
          %v216 = vld [vmem:[%s179] sm:$0xff]
          %s217 = smul.u32 %s23, 8
          %s218 = scalar_lea.vmem [#allocation5], %s217
          %v219 = vld [vmem:[%s218] sm:$0xff]
          %vm220 = vcmask 261120
          %v221 = vsel %vm220, %v216, -inf
          %222 = vmax.xlane.f32.xlu0 %v221
          %v223 = vpop.xlane.xlu0 %222
          %v224 = vsub.f32 %v216, %v223
          %v225 = vmul.f32 %v224, 1.442695
          %v226 = vpow.pop %v225
          %v227 = vsel %vm220, %v226, 0.0
          %228 = vadd.xlane.f32.xlu0 %v227
          %v229 = vpop.xlane.xlu0 %228
          %v230 = vlog2.pop %v229
          %v231 = vmul.f32 %v230, 0.6931472
          %v232 = vadd.f32 %v223, %v231
          %v233 = vlaneseq
          %v234 = vand.u32 %v233, 127
          %235 = vset.pattern.permute.xlu0 0
          %236 = vperm.xlu0 %235, %v219
          %v237 = vpop.permute.xlu0 %236
          %vm238 = vcmp.eq.s32.totalorder %v234, %v237
          %v239 = vsel %vm238, %v216, 0.0
          %v240 = vsel %vm220, %v239, 0.0
          %241 = vadd.xlane.f32.xlu0 %v240
          %v242 = vpop.xlane.xlu0 %241
          %v243 = vsub.f32 %v232, %v242
          %v244 = vsub.f32 0.0, %v243
          %v245 = vmul.f32 %v244, 1.442695
          %v246 = vpow.pop %v245
          %v247 = vsub.f32 1.0, %v246
          %v248 = vmax.f32 %v247, 0.0
          %v249 = vmul.f32 %v248, %v248
          %v250 = vmul.f32 %v249, %v243
          %v251 = vlaneseq
          %v252 = vshrl.u32 %v251, 7
          %s253 = ssub.s32 20, %s211
          %v254 = vstv %s253
          %vm255 = vcmp.lt.s32.totalorder %v252, %v254
          %v256 = vsel %vm255, %v250, 0.0
          %vm257 = vcmask 7168
          %v258 = vsel %vm257, %v256, 0.0
          %259 = vadd.xlane.f32.xlu0 %v258
          %v260 = vpop.xlane.xlu0 %259
          %v261 = vrot.slane %v260, 4
          %v262 = vadd.f32 %v260, %v261
          %v263 = vrot.slane %v262, 2
          %v264 = vadd.f32 %v262, %v263
          %v265 = vrot.slane %v264, 1
          %v266 = vadd.f32 %v264, %v265
          %s267 = vtos %v266
          %s268 = smul.f32 %s267, 0.05
          %v269 = vld [vmem:[#allocation7] sm:$0xff]
          %v270 = vstv %s268
          %v271 = vadd.f32 %v269, %v270
          %272 = vst [vmem:[#allocation7] sm:$0xff] %v271
        $region44: #{tpu_custom_call.1} parent=27 // pred_fallthru
          _
        // Predicated region
        $region45: #{tpu_custom_call.1} parent=27 // pred_check
          %p273 = pneg %p108
        $region46: #{tpu_custom_call.1} parent=27 // pred_check_branch
          %275 = sbr.rel (%p273) target = $region48
        $region47: #{tpu_custom_call.1} parent=27 // pred_region
          %s277 = ssub.s32 128, 128
          %278 = vsyncadd [#allocation4], %s277
          %s279 = smul.addr %s22, 128
          %s280 = scalar_lea.hbm %s2, %s279
          %s282 = sshll.u32 [#allocation7], 4
          %s283 = int_to_ptr.vmem [resolvable:$true] %s282
          %285 = dma.vmem_to_hbm [thread:$0]  %s283, 128, %s280, [#allocation4]
        $region48: #{tpu_custom_call.1} parent=27 // pred_fallthru
          _
        // Predicated region
        $region49: #{tpu_custom_call.1} parent=27 // pred_check
          %p286 = pneg %p108
        $region50: #{tpu_custom_call.1} parent=27 // pred_check_branch
          %288 = sbr.rel (%p286) target = $region52
        $region51: #{tpu_custom_call.1} parent=27 // pred_region
          %289 = dma.done [#allocation4], 128
        $region52: #{tpu_custom_call.1} parent=27 // pred_fallthru
          _
      $region28: #{tpu_custom_call.1} parent=5 // pred_fallthru
        _
      %p290 = scmp.le.s32.totalorder 2, %s13
      // Predicated region
      $region53: #{tpu_custom_call.1} parent=5 // pred_check
        %p291 = pneg %p290
      $region54: #{tpu_custom_call.1} parent=5 // pred_check_branch
        %293 = sbr.rel (%p291) target = $region56
      $region55: #{tpu_custom_call.1} parent=5 // pred_region
        %s294 = ssub.s32 %s13, 2
      $region56: #{tpu_custom_call.1} parent=5 // pred_fallthru
        _
    $region6: #{tpu_custom_call.1} parent=1 // loop_footer
      %s17 = sadd.s32 1, %s13
    $region7: #{tpu_custom_call.1} parent=1 // loop_footer_branch
      %12 = sbr.rel target = $region3
    $region8: #{tpu_custom_call.1} parent=1 // loop_exit
      _
    %295 = vsyncpa [#allocation3], 1
    %s296 = scalar_lea.sflag [#allocation3], 1
    %297 = vsyncpa %s296, 1
    %298 = vsyncpa [#allocation6], 1
    %299 = vsyncpa [#allocation4], 1
    %s300 = scalar_lea.sflag [#allocation4], 1
    %301 = vsyncpa %s300, 1

</llo_original>
